<compile_context>
chip_gen: v7x
topology: tpu7x:2x2x1
jax: 0.10.0
libtpu: 0.0.40
codegen_flags: <defaults>
</compile_context>

<pallas_src>
import math
from functools import partial

import jax
import jax.numpy as jnp
from jax import lax
from jax.experimental import pallas as pl
from jax.experimental.pallas import tpu as pltpu


def _pst_kernel(x_ref, bias_ref, abias_ref, pool_ref, wkqv_ref, wp_ref, bp_ref,
                out_ref, *, kh):
    """One grid step == block_b batch elements, everything kept 2-D and lane-friendly.

    x_ref:     (R, E)     R = block_b * T, tokens flattened batch-major
    bias_ref:  (R, KQV)   pe @ W_kqv + per-person K/Q embedding (zeros over the V columns)
    abias_ref: (R, R)     additive attention bias: 0 on-block & key unmasked, -1e30 otherwise
    pool_ref:  (BB, R)    1/T in each batch's row-block -> mean over seq as an MXU matmul
    wkqv_ref:  (E, KQV)   fused [2*Wk | 2*Wq/sqrt(KH) | 2*Wv]
    wp_ref:    (VH, NC), bp_ref: (1, NC), out_ref: (BB, NC)
    """
    # Fused K/Q/V projection: one (R, E) x (E, KQV) MXU matmul + one flat 2-D bias add.
    kqv = jnp.dot(x_ref[...], wkqv_ref[...],
                  preferred_element_type=jnp.float32) + bias_ref[...]            # (R, KQV)
    k = kqv[:, :kh]
    q = kqv[:, kh:2 * kh]
    v = kqv[:, 2 * kh:]

    # Flattened block-diagonal attention: single (R, KH) x (KH, R) matmul.  The additive bias
    # kills cross-batch and masked-key entries (exp underflows to exactly 0 after the row max).
    scores = lax.dot_general(q, k, (((1,), (1,)), ((), ())),
                             preferred_element_type=jnp.float32) + abias_ref[...]  # (R, R)
    smax = jnp.max(scores, axis=-1, keepdims=True)
    p = jnp.exp(scores - smax)
    attn = p * pl.reciprocal(jnp.sum(p, axis=-1, keepdims=True), approx=True)

    ctx = jnp.dot(attn, v, preferred_element_type=jnp.float32)                   # (R, VH)
    pooled = jnp.dot(pool_ref[...], ctx, preferred_element_type=jnp.float32)     # (BB, VH)
    logits = jnp.dot(pooled, wp_ref[...],
                     preferred_element_type=jnp.float32) + bp_ref[...]           # (BB, NC)

    # exact log_softmax
    lmax = jnp.max(logits, axis=-1, keepdims=True)
    lse = jnp.log(jnp.sum(jnp.exp(logits - lmax), axis=-1, keepdims=True)) + lmax
    out_ref[...] = logits - lse


def prepare_params(params):
    """One-time parameter transform: fuse Wk/Wq/Wv, fold the 2x token factor and the
    1/sqrt(KH) query scale, precompute the pe-projection bias."""
    kh = params["wk"].shape[1]
    inv = 1.0 / math.sqrt(kh)
    w_kqv = jnp.concatenate([params["wk"], params["wq"] * inv, params["wv"]], axis=1)
    return {
        "w_kqv2": 2.0 * w_kqv,                          # tokens term: x @ (2 W)
        "pe_bias": params["pe"] @ w_kqv,                # pe term:     pe @ W   (T, 2KH+VH)
        "emb_kq": jnp.concatenate([params["emb_k"], params["emb_q"] * inv], axis=1),
        "wp": params["wp"],
        "bp": params["bp"].reshape(1, -1),
        "kh": kh,
        "vh": params["wv"].shape[1],
    }


def _num_tensorcores_per_chip():
    """v7x exposes 2 TensorCores per chip (shard the batch grid across them); v5e/v6e have one,
    where an extra grid step is pure per-step (~0.35us) overhead."""
    try:
        kind = jax.devices()[0].device_kind.lower()
    except Exception:
        return 1
    return 2 if ("v7" in kind or "7x" in kind) else 1


def personalized_shallow_transformer(x, mask, person_idxs, prep, *, block_b=None):
    """x: (B,T,E) f32, mask: (B,1,T) bool, person_idxs: (B,) int32 -> (B, NC) log-probs."""
    B, T, E = x.shape
    kh, vh = prep["kh"], prep["vh"]
    w_kqv = prep["w_kqv2"]
    kqv_w = w_kqv.shape[1]                              # 2*KH + VH
    nc = prep["wp"].shape[1]

    # Generation-conditional grid: 1 step on single-TC chips, 2-way parallel on v7x.
    if block_b is None:
        n_tc = _num_tensorcores_per_chip()
        if n_tc >= 2 and B % n_tc == 0 and ((B // n_tc) * T) % 8 == 0:
            block_b = B // n_tc
        else:
            block_b = B
    assert B % block_b == 0, "block_b must divide B"
    n_blocks = B // block_b
    R = block_b * T
    assert R % 8 == 0, "block_b * T must be a multiple of 8 (sublane alignment)"

    # ---- glue (plain JAX, outside the kernel) ------------------------------------------
    # Per-row projection bias: pe @ W (per seq position) + person K/Q embedding (per batch).
    pers = jnp.concatenate(
        [prep["emb_kq"][person_idxs], jnp.zeros((B, vh), jnp.float32)], axis=1)   # (B, KQV)
    bias = (prep["pe_bias"][None, :, :] + pers[:, None, :]).reshape(B * T, kqv_w)  # (B*T, KQV)

    x_flat = x.reshape(B * T, E)

    # Block-diagonal additive attention bias: 0 where query & key share a batch AND the key is
    # unmasked, -1e30 otherwise.  Row r = b*T+t; columns index that row's block's keys.
    rows_b = jnp.repeat(jnp.arange(B), T)                       # (B*T,)  batch id of each row
    cols_bb = jnp.repeat(jnp.arange(block_b), T)                # (R,)    in-block batch id of key
    same = (rows_b % block_b)[:, None] == cols_bb[None, :]      # (B*T, R) block-diagonal pattern
    key_batch = (rows_b // block_b)[:, None] * block_b + cols_bb[None, :]   # (B*T, R) global key batch
    key_pos = jnp.tile(jnp.arange(T), block_b)[None, :]                     # (1, R)   key position
    key_ok = mask[:, 0, :][key_batch, key_pos]                              # (B*T, R) bool
    attn_bias = jnp.where(same & key_ok, 0.0, -1e30).astype(jnp.float32)    # (B*T, R)

    # Pooling matrix: mean over each batch's T rows, as a matmul.
    pool = (cols_bb[None, :] == jnp.arange(block_b)[:, None]).astype(jnp.float32) / T  # (BB, R)

    # ---- VMEM guard (review): the (R, R) score tile grows quadratically with block_b*T -----
    f32b = 4
    vmem_est = f32b * (
        2 * (R * E + R * kqv_w + R * R + block_b * nc)          # double-buffered per-block I/O
        + 2 * (block_b * R + E * kqv_w + vh * nc + nc)          # double-buffered constants
        + (R * kqv_w + 2 * R * R + R * vh + block_b * vh))      # rough in-kernel temporaries
    if vmem_est > 24 * 1024 * 1024:
        raise ValueError(
            f"block_b={block_b} needs ~{vmem_est / 2**20:.1f} MiB VMEM; shrink block_b or raise "
            "vmem_limit_bytes via pltpu.CompilerParams (v7x has only 64 MiB physical VMEM).")

    kernel = partial(_pst_kernel, kh=kh)
    out = pl.pallas_call(
        kernel,
        out_shape=jax.ShapeDtypeStruct((B, nc), jnp.float32),
        grid=(n_blocks,),
        in_specs=[
            pl.BlockSpec((R, E), lambda i: (i, 0)),              # x_flat        (per block)
            pl.BlockSpec((R, kqv_w), lambda i: (i, 0)),          # pe+person bias(per block)
            pl.BlockSpec((R, R), lambda i: (i, 0)),              # attention bias(per block)
            pl.BlockSpec((block_b, R), lambda i: (0, 0)),        # pooling matrix (constant)
            pl.BlockSpec((E, kqv_w), lambda i: (0, 0)),          # fused 2*W_kqv  (constant)
            pl.BlockSpec((vh, nc), lambda i: (0, 0)),            # Wout           (constant)
            pl.BlockSpec((1, nc), lambda i: (0, 0)),             # bout           (constant)
        ],
        out_specs=pl.BlockSpec((block_b, nc), lambda i: (i, 0)),
        compiler_params=pltpu.CompilerParams(
            dimension_semantics=("parallel",)),
    )(x_flat, bias, attn_bias, pool, w_kqv, prep["wp"], prep["bp"])
    return out                                                   # (B, NC)


def _reference(x, mask, person_idxs, params):
    """Plain-JAX replica of the PyTorch forward (eval mode, 'add' personalization)."""
    pe = params["pe"]
    x2 = 2.0 * x + pe[None]
    k = jnp.einsum('bte,ek->btk', x2, params["wk"]) + params["emb_k"][person_idxs][:, None, :]
    q = jnp.einsum('bte,ek->btk', x2, params["wq"]) + params["emb_q"][person_idxs][:, None, :]
    v = jnp.einsum('bte,ev->btv', x2, params["wv"])
    q = q / math.sqrt(params["wk"].shape[1])
    dot = jnp.einsum('btk,bsk->bts', q, k)
    dot = jnp.where(mask, dot, -jnp.inf)                 # (B,1,T) broadcasts over query axis
    attn = jax.nn.softmax(dot, axis=-1)
    ctx = jnp.einsum('bts,bsv->btv', attn, v)
    pooled = ctx.mean(axis=1)
    logits = pooled @ params["wp"] + params["bp"]
    return jax.nn.log_softmax(logits, axis=1)


def _make_params(key, T, E, KH, VH, NC, NP):
    ks = jax.random.split(key, 7)
    scale_e = 1.0 / math.sqrt(E)
    scale_v = 1.0 / math.sqrt(VH)
    params = {
        "wk": jax.random.uniform(ks[0], (E, KH), jnp.float32, -scale_e, scale_e),
        "wq": jax.random.uniform(ks[1], (E, KH), jnp.float32, -scale_e, scale_e),
        "wv": jax.random.uniform(ks[2], (E, VH), jnp.float32, -scale_e, scale_e),
        "wp": jax.random.uniform(ks[3], (VH, NC), jnp.float32, -scale_v, scale_v),
        "bp": jax.random.uniform(ks[4], (NC,), jnp.float32, -scale_v, scale_v),
        "emb_k": jax.random.normal(ks[5], (NP, KH), jnp.float32),
        "emb_q": jax.random.normal(ks[6], (NP, KH), jnp.float32),
    }
    # PositionalEncoding buffer pe[:T]
    position = jnp.arange(T, dtype=jnp.float32)[:, None]
    div_term = jnp.exp(jnp.arange(0, E, 2, dtype=jnp.float32) * (-math.log(10000.0) / E))
    pe = jnp.zeros((T, E), jnp.float32)
    pe = pe.at[:, 0::2].set(jnp.sin(position * div_term))
    pe = pe.at[:, 1::2].set(jnp.cos(position * div_term))
    params["pe"] = pe
    return params


if __name__ == "__main__":
    B, T, E = 16, 8, 32
    KH, VH, NC, NP = 32, 32, 2, 8

    key = jax.random.PRNGKey(0)
    k_param, k_x, k_p = jax.random.split(key, 3)

    params = _make_params(k_param, T, E, KH, VH, NC, NP)
    x = jax.random.normal(k_x, (B, T, E), jnp.float32)
    person_idxs = jax.random.randint(k_p, (B,), 0, NP, jnp.int32)
    # mask: mostly unmasked, a few batch elements mask trailing key positions
    mask = jnp.ones((B, 1, T), dtype=bool)
    mask = mask.at[1, 0, T - 2:].set(False)
    mask = mask.at[5, 0, T - 4:].set(False)
    mask = mask.at[11, 0, T - 1:].set(False)

    prep = prepare_params(params)
    out = personalized_shallow_transformer(x, mask, person_idxs, prep)
    out = jax.block_until_ready(out)

    ref = _reference(x, mask, person_idxs, params)
    # tolerance accounts for pl.reciprocal(approx=True) in the softmax normalizer
    if not jnp.allclose(out, ref, atol=5e-3, rtol=5e-3):
        raise AssertionError(f"mismatch vs reference:\n{out}\n{ref}")

    print("KERNEL_OK")
</pallas_src>

<mosaic_0001>
module attributes {stable_mosaic.version = 11 : i64} {
  func.func @_pst_kernel(%arg0: i32, %arg1: memref<128x32xf32, #tpu.memory_space<vmem>>, %arg2: memref<128x96xf32, #tpu.memory_space<vmem>>, %arg3: memref<128x128xf32, #tpu.memory_space<vmem>>, %arg4: memref<16x128xf32, #tpu.memory_space<vmem>>, %arg5: memref<32x96xf32, #tpu.memory_space<vmem>>, %arg6: memref<32x2xf32, #tpu.memory_space<vmem>>, %arg7: memref<1x2xf32, #tpu.memory_space<vmem>>, %arg8: memref<16x2xf32, #tpu.memory_space<vmem>>) attributes {dimension_semantics = [#tpu.dimension_semantics<parallel>], iteration_bounds = array<i64: 1>, scalar_prefetch = 0 : i64, scratch_operands = 0 : i64, tpu.core_type = #tpu.core_type<tc>, window_params = [{transform_indices = @transform_0, window_bounds = array<i64: 128, 32>}, {transform_indices = @transform_1, window_bounds = array<i64: 128, 96>}, {transform_indices = @transform_2, window_bounds = array<i64: 128, 128>}, {pipeline_mode = #tpu.pipeline_mode<synchronous>, transform_indices = @transform_3, window_bounds = array<i64: 16, 128>}, {pipeline_mode = #tpu.pipeline_mode<synchronous>, transform_indices = @transform_4, window_bounds = array<i64: 32, 96>}, {pipeline_mode = #tpu.pipeline_mode<synchronous>, transform_indices = @transform_5, window_bounds = array<i64: 32, 2>}, {pipeline_mode = #tpu.pipeline_mode<synchronous>, transform_indices = @transform_6, window_bounds = array<i64: 1, 2>}, {transform_indices = @transform_7, window_bounds = array<i64: 16, 2>}]} {
    %c0 = arith.constant 0 : index
    %c0_0 = arith.constant 0 : index
    %0 = vector.load %arg1[%c0, %c0_0] : memref<128x32xf32, #tpu.memory_space<vmem>>, vector<128x32xf32>
    %c0_1 = arith.constant 0 : index
    %c0_2 = arith.constant 0 : index
    %1 = vector.load %arg5[%c0_1, %c0_2] : memref<32x96xf32, #tpu.memory_space<vmem>>, vector<32x96xf32>
    %cst = arith.constant dense<0.000000e+00> : vector<128x96xf32>
    %2 = tpu.matmul %0, %1, %cst {dimension_numbers = #tpu.dot_dimension_numbers<[1], [0], [0], [1], [0, 0, 1, 1], [], []>} : vector<128x32xf32>, vector<32x96xf32>, vector<128x96xf32> -> vector<128x96xf32>
    %c0_3 = arith.constant 0 : index
    %c0_4 = arith.constant 0 : index
    %3 = vector.load %arg2[%c0_3, %c0_4] : memref<128x96xf32, #tpu.memory_space<vmem>>, vector<128x96xf32>
    %4 = arith.addf %2, %3 : vector<128x96xf32>
    %5 = vector.extract_strided_slice %4 {offsets = [0, 0], sizes = [128, 32], strides = [1, 1]} : vector<128x96xf32> to vector<128x32xf32>
    %6 = vector.extract_strided_slice %4 {offsets = [0, 32], sizes = [128, 32], strides = [1, 1]} : vector<128x96xf32> to vector<128x32xf32>
    %7 = vector.extract_strided_slice %4 {offsets = [0, 64], sizes = [128, 32], strides = [1, 1]} : vector<128x96xf32> to vector<128x32xf32>
    %cst_5 = arith.constant dense<0.000000e+00> : vector<128x128xf32>
    %8 = tpu.matmul %6, %5, %cst_5 {dimension_numbers = #tpu.dot_dimension_numbers<[1], [1], [0], [0], [0, 0, 1, 0], [], []>} : vector<128x32xf32>, vector<128x32xf32>, vector<128x128xf32> -> vector<128x128xf32>
    %c0_6 = arith.constant 0 : index
    %c0_7 = arith.constant 0 : index
    %9 = vector.load %arg3[%c0_6, %c0_7] : memref<128x128xf32, #tpu.memory_space<vmem>>, vector<128x128xf32>
    %10 = arith.addf %8, %9 : vector<128x128xf32>
    %cst_8 = arith.constant dense<0xFF800000> : vector<128xf32>
    %11 = vector.multi_reduction <maximumf>, %10, %cst_8 [1] : vector<128x128xf32> to vector<128xf32>
    %12 = vector.shape_cast %11 : vector<128xf32> to vector<128x1xf32>
    %13 = vector.broadcast %12 : vector<128x1xf32> to vector<128x128xf32>
    %14 = arith.subf %10, %13 : vector<128x128xf32>
    %15 = math.exp %14 : vector<128x128xf32>
    %cst_9 = arith.constant dense<0.000000e+00> : vector<128xf32>
    %16 = vector.multi_reduction <add>, %15, %cst_9 [1] : vector<128x128xf32> to vector<128xf32>
    %17 = vector.shape_cast %16 : vector<128xf32> to vector<128x1xf32>
    %18 = tpu.reciprocal %17 {approx = true} : vector<128x1xf32> -> vector<128x1xf32>
    %19 = vector.broadcast %18 : vector<128x1xf32> to vector<128x128xf32>
    %20 = arith.mulf %15, %19 : vector<128x128xf32>
    %cst_10 = arith.constant dense<0.000000e+00> : vector<128x32xf32>
    %21 = tpu.matmul %20, %7, %cst_10 {dimension_numbers = #tpu.dot_dimension_numbers<[1], [0], [0], [1], [0, 0, 1, 1], [], []>} : vector<128x128xf32>, vector<128x32xf32>, vector<128x32xf32> -> vector<128x32xf32>
    %c0_11 = arith.constant 0 : index
    %c0_12 = arith.constant 0 : index
    %22 = vector.load %arg4[%c0_11, %c0_12] : memref<16x128xf32, #tpu.memory_space<vmem>>, vector<16x128xf32>
    %cst_13 = arith.constant dense<0.000000e+00> : vector<16x32xf32>
    %23 = tpu.matmul %22, %21, %cst_13 {dimension_numbers = #tpu.dot_dimension_numbers<[1], [0], [0], [1], [0, 0, 1, 1], [], []>} : vector<16x128xf32>, vector<128x32xf32>, vector<16x32xf32> -> vector<16x32xf32>
    %c0_14 = arith.constant 0 : index
    %c0_15 = arith.constant 0 : index
    %24 = vector.load %arg6[%c0_14, %c0_15] : memref<32x2xf32, #tpu.memory_space<vmem>>, vector<32x2xf32>
    %cst_16 = arith.constant dense<0.000000e+00> : vector<16x2xf32>
    %25 = tpu.matmul %23, %24, %cst_16 {dimension_numbers = #tpu.dot_dimension_numbers<[1], [0], [0], [1], [0, 0, 1, 1], [], []>} : vector<16x32xf32>, vector<32x2xf32>, vector<16x2xf32> -> vector<16x2xf32>
    %c0_17 = arith.constant 0 : index
    %c0_18 = arith.constant 0 : index
    %26 = vector.load %arg7[%c0_17, %c0_18] : memref<1x2xf32, #tpu.memory_space<vmem>>, vector<1x2xf32>
    %27 = vector.broadcast %26 : vector<1x2xf32> to vector<16x2xf32>
    %28 = arith.addf %25, %27 : vector<16x2xf32>
    %cst_19 = arith.constant dense<0xFF800000> : vector<16xf32>
    %29 = vector.multi_reduction <maximumf>, %28, %cst_19 [1] : vector<16x2xf32> to vector<16xf32>
    %30 = vector.shape_cast %29 : vector<16xf32> to vector<16x1xf32>
    %31 = vector.broadcast %30 : vector<16x1xf32> to vector<16x2xf32>
    %32 = arith.subf %28, %31 : vector<16x2xf32>
    %33 = math.exp %32 : vector<16x2xf32>
    %cst_20 = arith.constant dense<0.000000e+00> : vector<16xf32>
    %34 = vector.multi_reduction <add>, %33, %cst_20 [1] : vector<16x2xf32> to vector<16xf32>
    %35 = vector.shape_cast %34 : vector<16xf32> to vector<16x1xf32>
    %36 = math.log %35 : vector<16x1xf32>
    %37 = arith.addf %36, %30 : vector<16x1xf32>
    %38 = vector.broadcast %37 : vector<16x1xf32> to vector<16x2xf32>
    %39 = arith.subf %28, %38 : vector<16x2xf32>
    %c0_21 = arith.constant 0 : index
    %c0_22 = arith.constant 0 : index
    %40 = vector.load %arg8[%c0_21, %c0_22] : memref<16x2xf32, #tpu.memory_space<vmem>>, vector<16x2xf32>
    tpu.vector_store %arg8[%c0_21, %c0_22], %39 {strides = array<i32>} : memref<16x2xf32, #tpu.memory_space<vmem>>, vector<16x2xf32>,
    return
  }
  func.func @transform_0(%arg0: i32) -> (i32, i32) {
    %c0_i32 = arith.constant 0 : i32
    %c0_i32_0 = arith.constant 0 : i32
    return %arg0, %c0_i32 : i32, i32
  }
  func.func @transform_1(%arg0: i32) -> (i32, i32) {
    %c0_i32 = arith.constant 0 : i32
    %c0_i32_0 = arith.constant 0 : i32
    return %arg0, %c0_i32 : i32, i32
  }
  func.func @transform_2(%arg0: i32) -> (i32, i32) {
    %c0_i32 = arith.constant 0 : i32
    %c0_i32_0 = arith.constant 0 : i32
    return %arg0, %c0_i32 : i32, i32
  }
  func.func @transform_3(%arg0: i32) -> (i32, i32) {
    %c0_i32 = arith.constant 0 : i32
    %c0_i32_0 = arith.constant 0 : i32
    %c0_i32_1 = arith.constant 0 : i32
    return %c0_i32, %c0_i32_0 : i32, i32
  }
  func.func @transform_4(%arg0: i32) -> (i32, i32) {
    %c0_i32 = arith.constant 0 : i32
    %c0_i32_0 = arith.constant 0 : i32
    %c0_i32_1 = arith.constant 0 : i32
    return %c0_i32, %c0_i32_0 : i32, i32
  }
  func.func @transform_5(%arg0: i32) -> (i32, i32) {
    %c0_i32 = arith.constant 0 : i32
    %c0_i32_0 = arith.constant 0 : i32
    %c0_i32_1 = arith.constant 0 : i32
    return %c0_i32, %c0_i32_0 : i32, i32
  }
  func.func @transform_6(%arg0: i32) -> (i32, i32) {
    %c0_i32 = arith.constant 0 : i32
    %c0_i32_0 = arith.constant 0 : i32
    %c0_i32_1 = arith.constant 0 : i32
    return %c0_i32, %c0_i32_0 : i32, i32
  }
  func.func @transform_7(%arg0: i32) -> (i32, i32) {
    %c0_i32 = arith.constant 0 : i32
    %c0_i32_0 = arith.constant 0 : i32
    return %arg0, %c0_i32 : i32, i32
  }
}

</mosaic_0001>

<llo_original>
// kernel: tpu_custom_call.1
$region0: #{tpu_custom_call.1}
  #allocation0 [shape = 'u32[]', space=smem, size = 0x4, offset = 0x4, fixed_abs, tag = 'smem constant byte address 0x4 - core index']
  #allocation1 [shape = 'u32[144,128]{1,0:T(1,128)}', space=vmem, size = 0x12000, scoped, tag = 'internal scratch']
  %s0 = inlined_call_operand.vmem [shape: f32[128,32], index: 0, kind: input, shape index: {}]
  %s1 = inlined_call_operand.vmem [shape: f32[128,96], index: 1, kind: input, shape index: {}]
  %s2 = inlined_call_operand.vmem [shape: f32[128,128], index: 2, kind: input, shape index: {}]
  %s3 = inlined_call_operand.vmem [shape: f32[16,128], index: 3, kind: input, shape index: {}]
  %s4 = inlined_call_operand.vmem [shape: f32[32,96], index: 4, kind: input, shape index: {}]
  %s5 = inlined_call_operand.vmem [shape: f32[32,2], index: 5, kind: input, shape index: {}]
  %s6 = inlined_call_operand.vmem [shape: f32[1,2], index: 6, kind: input, shape index: {}]
  %s7 = inlined_call_operand.vmem [shape: f32[16,2], index: 7, kind: output, shape index: {}]
  %s8 = sld [smem:[#allocation0]]
  $region38: #{tpu_custom_call.1} parent=0
    _
  %s10 = ssub.s32 1, %s8
  %s11 = scalar_select 0, %s10, %s8
  // Predicated region
  $region2: #{tpu_custom_call.1} parent=0 // pred_check
    _
  $region3: #{tpu_custom_call.1} parent=0 // pred_check_branch
    %13 = sbr.rel (0) target = $region5
  $region4: #{tpu_custom_call.1} parent=0 // pred_region
    _
  $region5: #{tpu_custom_call.1} parent=0 // pred_fallthru
    _
  // Predicated region
  $region6: #{tpu_custom_call.1} parent=0 // pred_check
    _
  $region7: #{tpu_custom_call.1} parent=0 // pred_check_branch
    %15 = sbr.rel (0) target = $region9
  $region8: #{tpu_custom_call.1} parent=0 // pred_region
    _
  $region9: #{tpu_custom_call.1} parent=0 // pred_fallthru
    _
  // Predicated region
  $region10: #{tpu_custom_call.1} parent=0 // pred_check
    _
  $region11: #{tpu_custom_call.1} parent=0 // pred_check_branch
    %17 = sbr.rel (0) target = $region13
  $region12: #{tpu_custom_call.1} parent=0 // pred_region
    _
  $region13: #{tpu_custom_call.1} parent=0 // pred_fallthru
    _
  // Predicated region
  $region14: #{tpu_custom_call.1} parent=0 // pred_check
    _
  $region15: #{tpu_custom_call.1} parent=0 // pred_check_branch
    %19 = sbr.rel (0) target = $region17
  $region16: #{tpu_custom_call.1} parent=0 // pred_region
    _
  $region17: #{tpu_custom_call.1} parent=0 // pred_fallthru
    _
  // Predicated region
  $region18: #{tpu_custom_call.1} parent=0 // pred_check
    _
  $region19: #{tpu_custom_call.1} parent=0 // pred_check_branch
    %21 = sbr.rel (0) target = $region21
  $region20: #{tpu_custom_call.1} parent=0 // pred_region
    _
  $region21: #{tpu_custom_call.1} parent=0 // pred_fallthru
    _
  // Predicated region
  $region22: #{tpu_custom_call.1} parent=0 // pred_check
    _
  $region23: #{tpu_custom_call.1} parent=0 // pred_check_branch
    %23 = sbr.rel (0) target = $region25
  $region24: #{tpu_custom_call.1} parent=0 // pred_region
    _
  $region25: #{tpu_custom_call.1} parent=0 // pred_fallthru
    _
  // Predicated region
  $region26: #{tpu_custom_call.1} parent=0 // pred_check
    _
  $region27: #{tpu_custom_call.1} parent=0 // pred_check_branch
    %25 = sbr.rel (0) target = $region29
  $region28: #{tpu_custom_call.1} parent=0 // pred_region
    _
  $region29: #{tpu_custom_call.1} parent=0 // pred_fallthru
    _
  %v26 = vld [vmem:[%s0] sm:$0xff]
  %v27 = vld [vmem:[%s0 + $0x8] sm:$0xff]
  %v28 = vld [vmem:[%s0 + $0x10] sm:$0xff]
  %v29 = vld [vmem:[%s0 + $0x18] sm:$0xff]
  %v30 = vld [vmem:[%s0 + $0x20] sm:$0xff]
  %v31 = vld [vmem:[%s0 + $0x28] sm:$0xff]
  %v32 = vld [vmem:[%s0 + $0x30] sm:$0xff]
  %v33 = vld [vmem:[%s0 + $0x38] sm:$0xff]
  %v34 = vld [vmem:[%s0 + $0x40] sm:$0xff]
  %v35 = vld [vmem:[%s0 + $0x48] sm:$0xff]
  %v36 = vld [vmem:[%s0 + $0x50] sm:$0xff]
  %v37 = vld [vmem:[%s0 + $0x58] sm:$0xff]
  %v38 = vld [vmem:[%s0 + $0x60] sm:$0xff]
  %v39 = vld [vmem:[%s0 + $0x68] sm:$0xff]
  %v40 = vld [vmem:[%s0 + $0x70] sm:$0xff]
  %v41 = vld [vmem:[%s0 + $0x78] sm:$0xff]
  %v42 = vld [vmem:[%s4] sm:$0xff]
  %v43 = vld [vmem:[%s4 + $0x8] sm:$0xff]
  %v44 = vld [vmem:[%s4 + $0x10] sm:$0xff]
  %v45 = vld [vmem:[%s4 + $0x18] sm:$0xff]
  %v46 = vld [vmem:[%s1] sm:$0xff]
  %v47 = vld [vmem:[%s1 + $0x8] sm:$0xff]
  %v48 = vld [vmem:[%s1 + $0x10] sm:$0xff]
  %v49 = vld [vmem:[%s1 + $0x18] sm:$0xff]
  %v50 = vld [vmem:[%s1 + $0x20] sm:$0xff]
  %v51 = vld [vmem:[%s1 + $0x28] sm:$0xff]
  %v52 = vld [vmem:[%s1 + $0x30] sm:$0xff]
  %v53 = vld [vmem:[%s1 + $0x38] sm:$0xff]
  %v54 = vld [vmem:[%s1 + $0x40] sm:$0xff]
  %v55 = vld [vmem:[%s1 + $0x48] sm:$0xff]
  %v56 = vld [vmem:[%s1 + $0x50] sm:$0xff]
  %v57 = vld [vmem:[%s1 + $0x58] sm:$0xff]
  %v58 = vld [vmem:[%s1 + $0x60] sm:$0xff]
  %v59 = vld [vmem:[%s1 + $0x68] sm:$0xff]
  %v60 = vld [vmem:[%s1 + $0x70] sm:$0xff]
  %v61 = vld [vmem:[%s1 + $0x78] sm:$0xff]
  %vm62 = vcmask 261120
  %v64 = vsel %vm62, %v26, 0
  %v67 = vsel %vm62, %v27, 0
  %v70 = vsel %vm62, %v28, 0
  %v73 = vsel %vm62, %v29, 0
  %v76 = vsel %vm62, %v30, 0
  %v79 = vsel %vm62, %v31, 0
  %v82 = vsel %vm62, %v32, 0
  %v85 = vsel %vm62, %v33, 0
  %v88 = vsel %vm62, %v34, 0
  %v91 = vsel %vm62, %v35, 0
  %v94 = vsel %vm62, %v36, 0
  %v97 = vsel %vm62, %v37, 0
  %v100 = vsel %vm62, %v38, 0
  %v103 = vsel %vm62, %v39, 0
  %v106 = vsel %vm62, %v40, 0
  %v109 = vsel %vm62, %v41, 0
  %111 = vmatprep.subr.mxu0 0.0
  %112 = vmatpush1.msra.mxu0 %v42
  %113 = vmatprep.subr.mxu0 0.0
  %114 = vmatpush1.msra.mxu0 %v43
  %115 = vmatprep.subr.mxu0 0.0
  %116 = vmatpush1.msra.mxu0 %v44
  %117 = vmatprep.subr.mxu0 0.0
  %118 = vmatpush1.msra.mxu0 %v45
  %119 = vmatprep.subr.mxu0 0.0
  %120 = vmatpush1.msra.mxu0 0.0
  %121 = vmatprep.subr.mxu0 0.0
  %122 = vmatpush1.msra.mxu0 0.0
  %123 = vmatprep.subr.mxu0 0.0
  %124 = vmatpush1.msra.mxu0 0.0
  %125 = vmatprep.subr.mxu0 0.0
  %126 = vmatpush1.msra.mxu0 0.0
  %127 = vmatprep.subr.mxu0 0.0
  %128 = vmatpush1.msra.mxu0 0.0
  %129 = vmatprep.subr.mxu0 0.0
  %130 = vmatpush1.msra.mxu0 0.0
  %131 = vmatprep.subr.mxu0 0.0
  %132 = vmatpush1.msra.mxu0 0.0
  %133 = vmatprep.subr.mxu0 0.0
  %134 = vmatpush1.msra.mxu0 0.0
  %135 = vmatprep.subr.mxu0 0.0
  %136 = vmatpush1.msra.mxu0 0.0
  %137 = vmatprep.subr.mxu0 0.0
  %138 = vmatpush1.msra.mxu0 0.0
  %139 = vmatprep.subr.mxu0 0.0
  %140 = vmatpush1.msra.mxu0 0.0
  %141 = vmatprep.subr.mxu0 0.0
  %142 = vmatpush1.msra.mxu0 0.0
  %143 = vmatprep.subr.mxu0 0.0
  %144 = vmatpush1.msra.mxu0 0.0
  %145 = vmatprep.subr.mxu0 0.0
  %146 = vmatpush1.msra.mxu0 0.0
  %147 = vmatprep.subr.mxu0 0.0
  %148 = vmatpush1.msra.mxu0 0.0
  %149 = vmatprep.subr.mxu0 0.0
  %150 = vmatpush1.msra.mxu0 0.0
  %151 = vmatprep.subr.mxu0 0.0
  %152 = vmatpush1.msra.mxu0 0.0
  %153 = vmatprep.subr.mxu0 0.0
  %154 = vmatpush1.msra.mxu0 0.0
  %155 = vmatprep.subr.mxu0 0.0
  %156 = vmatpush1.msra.mxu0 0.0
  %157 = vmatprep.subr.mxu0 0.0
  %158 = vmatpush1.msra.mxu0 0.0
  %159 = vmatprep.subr.mxu0 0.0
  %160 = vmatpush1.msra.mxu0 0.0
  %161 = vmatprep.subr.mxu0 0.0
  %162 = vmatpush1.msra.mxu0 0.0
  %163 = vmatprep.subr.mxu0 0.0
  %164 = vmatpush1.msra.mxu0 0.0
  %165 = vmatprep.subr.mxu0 0.0
  %166 = vmatpush1.msra.mxu0 0.0
  %167 = vmatprep.subr.mxu0 0.0
  %168 = vmatpush1.msra.mxu0 0.0
  %169 = vmatprep.subr.mxu0 0.0
  %170 = vmatpush1.msra.mxu0 0.0
  %171 = vmatprep.subr.mxu0 0.0
  %172 = vmatpush1.msra.mxu0 0.0
  %173 = vmatprep.subr.mxu0 0.0
  %174 = vmatpush1.msra.mxu0 0.0
  %175 = vmatprep.mubr.f32.mxu0 0.0
  %176 = vmatmul.mubr.f32.gmra.mrb[0].mxu0 %v64
  %v177 = vpop.f32.mrb[0].mxu0
  %v178 = vadd.f32 %v46, %v177
  %v179 = vpop.f32.mrb[0].mxu0
  %180 = vmatprep.mubr.f32.mxu0 0.0
  %181 = vmatmul.mubr.f32.gmra.mrb[0].mxu0 %v67
  %v182 = vpop.f32.mrb[0].mxu0
  %v183 = vadd.f32 %v47, %v182
  %v184 = vpop.f32.mrb[0].mxu0
  %185 = vmatprep.mubr.f32.mxu0 0.0
  %186 = vmatmul.mubr.f32.gmra.mrb[0].mxu0 %v70
  %v187 = vpop.f32.mrb[0].mxu0
  %v188 = vadd.f32 %v48, %v187
  %v189 = vpop.f32.mrb[0].mxu0
  %190 = vmatprep.mubr.f32.mxu0 0.0
  %191 = vmatmul.mubr.f32.gmra.mrb[0].mxu0 %v73
  %v192 = vpop.f32.mrb[0].mxu0
  %v193 = vadd.f32 %v49, %v192
  %v194 = vpop.f32.mrb[0].mxu0
  %195 = vmatprep.mubr.f32.mxu0 0.0
  %196 = vmatmul.mubr.f32.gmra.mrb[0].mxu0 %v76
  %v197 = vpop.f32.mrb[0].mxu0
  %v198 = vadd.f32 %v50, %v197
  %v199 = vpop.f32.mrb[0].mxu0
  %200 = vmatprep.mubr.f32.mxu0 0.0
  %201 = vmatmul.mubr.f32.gmra.mrb[0].mxu0 %v79
  %v202 = vpop.f32.mrb[0].mxu0
  %v203 = vadd.f32 %v51, %v202
  %v204 = vpop.f32.mrb[0].mxu0
  %205 = vmatprep.mubr.f32.mxu0 0.0
  %206 = vmatmul.mubr.f32.gmra.mrb[0].mxu0 %v82
  %v207 = vpop.f32.mrb[0].mxu0
  %v208 = vadd.f32 %v52, %v207
  %v209 = vpop.f32.mrb[0].mxu0
  %210 = vmatprep.mubr.f32.mxu0 0.0
  %211 = vmatmul.mubr.f32.gmra.mrb[0].mxu0 %v85
  %v212 = vpop.f32.mrb[0].mxu0
  %v213 = vadd.f32 %v53, %v212
  %v214 = vpop.f32.mrb[0].mxu0
  %215 = vmatprep.mubr.f32.mxu0 0.0
  %216 = vmatmul.mubr.f32.gmra.mrb[0].mxu0 %v88
  %v217 = vpop.f32.mrb[0].mxu0
  %v218 = vadd.f32 %v54, %v217
  %v219 = vpop.f32.mrb[0].mxu0
  %220 = vmatprep.mubr.f32.mxu0 0.0
  %221 = vmatmul.mubr.f32.gmra.mrb[0].mxu0 %v91
  %v222 = vpop.f32.mrb[0].mxu0
  %v223 = vadd.f32 %v55, %v222
  %v224 = vpop.f32.mrb[0].mxu0
  %225 = vmatprep.mubr.f32.mxu0 0.0
  %226 = vmatmul.mubr.f32.gmra.mrb[0].mxu0 %v94
  %v227 = vpop.f32.mrb[0].mxu0
  %v228 = vadd.f32 %v56, %v227
  %v229 = vpop.f32.mrb[0].mxu0
  %230 = vmatprep.mubr.f32.mxu0 0.0
  %231 = vmatmul.mubr.f32.gmra.mrb[0].mxu0 %v97
  %v232 = vpop.f32.mrb[0].mxu0
  %v233 = vadd.f32 %v57, %v232
  %v234 = vpop.f32.mrb[0].mxu0
  %235 = vmatprep.mubr.f32.mxu0 0.0
  %236 = vmatmul.mubr.f32.gmra.mrb[0].mxu0 %v100
  %v237 = vpop.f32.mrb[0].mxu0
  %v238 = vadd.f32 %v58, %v237
  %v239 = vpop.f32.mrb[0].mxu0
  %240 = vmatprep.mubr.f32.mxu0 0.0
  %241 = vmatmul.mubr.f32.gmra.mrb[0].mxu0 %v103
  %v242 = vpop.f32.mrb[0].mxu0
  %v243 = vadd.f32 %v59, %v242
  %v244 = vpop.f32.mrb[0].mxu0
  %245 = vmatprep.mubr.f32.mxu0 0.0
  %246 = vmatmul.mubr.f32.gmra.mrb[0].mxu0 %v106
  %v247 = vpop.f32.mrb[0].mxu0
  %v248 = vadd.f32 %v60, %v247
  %v249 = vpop.f32.mrb[0].mxu0
  %250 = vmatprep.mubr.f32.mxu0 0.0
  %251 = vmatmul.mubr.f32.gmra.mrb[0].mxu0 %v109
  %v252 = vpop.f32.mrb[0].mxu0
  %v253 = vadd.f32 %v61, %v252
  %v254 = vpop.f32.mrb[0].mxu0
  %255 = vdwg.mxu0
  %v256 = vld [vmem:[%s2] sm:$0xff]
  %v257 = vld [vmem:[%s2 + $0x8] sm:$0xff]
  %v258 = vld [vmem:[%s2 + $0x10] sm:$0xff]
  %v259 = vld [vmem:[%s2 + $0x18] sm:$0xff]
  %v260 = vld [vmem:[%s2 + $0x20] sm:$0xff]
  %v261 = vld [vmem:[%s2 + $0x28] sm:$0xff]
  %v262 = vld [vmem:[%s2 + $0x30] sm:$0xff]
  %v263 = vld [vmem:[%s2 + $0x38] sm:$0xff]
  %v264 = vld [vmem:[%s2 + $0x40] sm:$0xff]
  %v265 = vld [vmem:[%s2 + $0x48] sm:$0xff]
  %v266 = vld [vmem:[%s2 + $0x50] sm:$0xff]
  %v267 = vld [vmem:[%s2 + $0x58] sm:$0xff]
  %v268 = vld [vmem:[%s2 + $0x60] sm:$0xff]
  %v269 = vld [vmem:[%s2 + $0x68] sm:$0xff]
  %v270 = vld [vmem:[%s2 + $0x70] sm:$0xff]
  %v271 = vld [vmem:[%s2 + $0x78] sm:$0xff]
  %288 = vrot.lane.b32.xlu0 %v178, 96
  %v289 = vpop.permute.xlu0 %288
  %290 = vrot.lane.b32.xlu0 %v183, 96
  %v291 = vpop.permute.xlu0 %290
  %292 = vrot.lane.b32.xlu0 %v188, 96
  %v293 = vpop.permute.xlu0 %292
  %294 = vrot.lane.b32.xlu0 %v193, 96
  %v295 = vpop.permute.xlu0 %294
  %296 = vrot.lane.b32.xlu0 %v198, 96
  %v297 = vpop.permute.xlu0 %296
  %298 = vrot.lane.b32.xlu0 %v203, 96
  %v299 = vpop.permute.xlu0 %298
  %300 = vrot.lane.b32.xlu0 %v208, 96
  %v301 = vpop.permute.xlu0 %300
  %302 = vrot.lane.b32.xlu0 %v213, 96
  %v303 = vpop.permute.xlu0 %302
  %304 = vrot.lane.b32.xlu0 %v218, 96
  %v305 = vpop.permute.xlu0 %304
  %306 = vrot.lane.b32.xlu0 %v223, 96
  %v307 = vpop.permute.xlu0 %306
  %308 = vrot.lane.b32.xlu0 %v228, 96
  %v309 = vpop.permute.xlu0 %308
  %310 = vrot.lane.b32.xlu0 %v233, 96
  %v311 = vpop.permute.xlu0 %310
  %312 = vrot.lane.b32.xlu0 %v238, 96
  %v313 = vpop.permute.xlu0 %312
  %314 = vrot.lane.b32.xlu0 %v243, 96
  %v315 = vpop.permute.xlu0 %314
  %316 = vrot.lane.b32.xlu0 %v248, 96
  %v317 = vpop.permute.xlu0 %316
  %318 = vrot.lane.b32.xlu0 %v253, 96
  %v319 = vpop.permute.xlu0 %318
  %v320 = vsel %vm62, %v289, 0
  %v322 = vsel %vm62, %v291, 0
  %v324 = vsel %vm62, %v293, 0
  %v326 = vsel %vm62, %v295, 0
  %v328 = vsel %vm62, %v297, 0
  %v330 = vsel %vm62, %v299, 0
  %v332 = vsel %vm62, %v301, 0
  %v334 = vsel %vm62, %v303, 0
  %v336 = vsel %vm62, %v305, 0
  %v338 = vsel %vm62, %v307, 0
  %v340 = vsel %vm62, %v309, 0
  %v342 = vsel %vm62, %v311, 0
  %v344 = vsel %vm62, %v313, 0
  %v346 = vsel %vm62, %v315, 0
  %v348 = vsel %vm62, %v317, 0
  %v350 = vsel %vm62, %v319, 0
  %v352 = vsel %vm62, %v178, 0
  %v354 = vsel %vm62, %v183, 0
  %v356 = vsel %vm62, %v188, 0
  %v358 = vsel %vm62, %v193, 0
  %v360 = vsel %vm62, %v198, 0
  %v362 = vsel %vm62, %v203, 0
  %v364 = vsel %vm62, %v208, 0
  %v366 = vsel %vm62, %v213, 0
  %v368 = vsel %vm62, %v218, 0
  %v370 = vsel %vm62, %v223, 0
  %v372 = vsel %vm62, %v228, 0
  %v374 = vsel %vm62, %v233, 0
  %v376 = vsel %vm62, %v238, 0
  %v378 = vsel %vm62, %v243, 0
  %v380 = vsel %vm62, %v248, 0
  %v382 = vsel %vm62, %v253, 0
  %384 = vmatprep.subr.mxu0 0.0
  %385 = vmatpush1.xpose.msra.mxu0 %v352
  %386 = vmatprep.subr.mxu0 0.0
  %387 = vmatpush1.xpose.msra.mxu0 %v354
  %388 = vmatprep.subr.mxu0 0.0
  %389 = vmatpush1.xpose.msra.mxu0 %v356
  %390 = vmatprep.subr.mxu0 0.0
  %391 = vmatpush1.xpose.msra.mxu0 %v358
  %392 = vmatprep.subr.mxu0 0.0
  %393 = vmatpush1.xpose.msra.mxu0 %v360
  %394 = vmatprep.subr.mxu0 0.0
  %395 = vmatpush1.xpose.msra.mxu0 %v362
  %396 = vmatprep.subr.mxu0 0.0
  %397 = vmatpush1.xpose.msra.mxu0 %v364
  %398 = vmatprep.subr.mxu0 0.0
  %399 = vmatpush1.xpose.msra.mxu0 %v366
  %400 = vmatprep.subr.mxu0 0.0
  %401 = vmatpush1.xpose.msra.mxu0 %v368
  %402 = vmatprep.subr.mxu0 0.0
  %403 = vmatpush1.xpose.msra.mxu0 %v370
  %404 = vmatprep.subr.mxu0 0.0
  %405 = vmatpush1.xpose.msra.mxu0 %v372
  %406 = vmatprep.subr.mxu0 0.0
  %407 = vmatpush1.xpose.msra.mxu0 %v374
  %408 = vmatprep.subr.mxu0 0.0
  %409 = vmatpush1.xpose.msra.mxu0 %v376
  %410 = vmatprep.subr.mxu0 0.0
  %411 = vmatpush1.xpose.msra.mxu0 %v378
  %412 = vmatprep.subr.mxu0 0.0
  %413 = vmatpush1.xpose.msra.mxu0 %v380
  %414 = vmatprep.subr.mxu0 0.0
  %415 = vmatpush1.xpose.msra.mxu0 %v382
  %416 = vmatprep.subr.mxu0 0.0
  %417 = vmatpush1.xpose.msra.mxu0 0.0
  %418 = vmatprep.subr.mxu0 0.0
  %419 = vmatpush1.xpose.msra.mxu0 0.0
  %420 = vmatprep.subr.mxu0 0.0
  %421 = vmatpush1.xpose.msra.mxu0 0.0
  %422 = vmatprep.subr.mxu0 0.0
  %423 = vmatpush1.xpose.msra.mxu0 0.0
  %424 = vmatprep.subr.mxu0 0.0
  %425 = vmatpush1.xpose.msra.mxu0 0.0
  %426 = vmatprep.subr.mxu0 0.0
  %427 = vmatpush1.xpose.msra.mxu0 0.0
  %428 = vmatprep.subr.mxu0 0.0
  %429 = vmatpush1.xpose.msra.mxu0 0.0
  %430 = vmatprep.subr.mxu0 0.0
  %431 = vmatpush1.xpose.msra.mxu0 0.0
  %432 = vmatprep.subr.mxu0 0.0
  %433 = vmatpush1.xpose.msra.mxu0 0.0
  %434 = vmatprep.subr.mxu0 0.0
  %435 = vmatpush1.xpose.msra.mxu0 0.0
  %436 = vmatprep.subr.mxu0 0.0
  %437 = vmatpush1.xpose.msra.mxu0 0.0
  %438 = vmatprep.subr.mxu0 0.0
  %439 = vmatpush1.xpose.msra.mxu0 0.0
  %440 = vmatprep.subr.mxu0 0.0
  %441 = vmatpush1.xpose.msra.mxu0 0.0
  %442 = vmatprep.subr.mxu0 0.0
  %443 = vmatpush1.xpose.msra.mxu0 0.0
  %444 = vmatprep.subr.mxu0 0.0
  %445 = vmatpush1.xpose.msra.mxu0 0.0
  %446 = vmatprep.subr.mxu0 0.0
  %447 = vmatpush1.xpose.msra.mxu0 0.0
  %448 = vmatprep.mubr.f32.mxu0 0.0
  %449 = vmatmul.mubr.f32.gmra.mrb[0].mxu0 %v320
  %v450 = vpop.f32.mrb[0].mxu0
  %v451 = vadd.f32 %v256, %v450
  %v452 = vpop.f32.mrb[0].mxu0
  %453 = vmatprep.mubr.f32.mxu0 0.0
  %454 = vmatmul.mubr.f32.gmra.mrb[0].mxu0 %v322
  %v455 = vpop.f32.mrb[0].mxu0
  %v456 = vadd.f32 %v257, %v455
  %v457 = vpop.f32.mrb[0].mxu0
  %458 = vmatprep.mubr.f32.mxu0 0.0
  %459 = vmatmul.mubr.f32.gmra.mrb[0].mxu0 %v324
  %v460 = vpop.f32.mrb[0].mxu0
  %v461 = vadd.f32 %v258, %v460
  %v462 = vpop.f32.mrb[0].mxu0
  %463 = vmatprep.mubr.f32.mxu0 0.0
  %464 = vmatmul.mubr.f32.gmra.mrb[0].mxu0 %v326
  %v465 = vpop.f32.mrb[0].mxu0
  %v466 = vadd.f32 %v259, %v465
  %v467 = vpop.f32.mrb[0].mxu0
  %468 = vmatprep.mubr.f32.mxu0 0.0
  %469 = vmatmul.mubr.f32.gmra.mrb[0].mxu0 %v328
  %v470 = vpop.f32.mrb[0].mxu0
  %v471 = vadd.f32 %v260, %v470
  %v472 = vpop.f32.mrb[0].mxu0
  %473 = vmatprep.mubr.f32.mxu0 0.0
  %474 = vmatmul.mubr.f32.gmra.mrb[0].mxu0 %v330
  %v475 = vpop.f32.mrb[0].mxu0
  %v476 = vadd.f32 %v261, %v475
  %v477 = vpop.f32.mrb[0].mxu0
  %478 = vmatprep.mubr.f32.mxu0 0.0
  %479 = vmatmul.mubr.f32.gmra.mrb[0].mxu0 %v332
  %v480 = vpop.f32.mrb[0].mxu0
  %v481 = vadd.f32 %v262, %v480
  %v482 = vpop.f32.mrb[0].mxu0
  %483 = vmatprep.mubr.f32.mxu0 0.0
  %484 = vmatmul.mubr.f32.gmra.mrb[0].mxu0 %v334
  %v485 = vpop.f32.mrb[0].mxu0
  %v486 = vadd.f32 %v263, %v485
  %v487 = vpop.f32.mrb[0].mxu0
  %488 = vmatprep.mubr.f32.mxu0 0.0
  %489 = vmatmul.mubr.f32.gmra.mrb[0].mxu0 %v336
  %v490 = vpop.f32.mrb[0].mxu0
  %v491 = vadd.f32 %v264, %v490
  %v492 = vpop.f32.mrb[0].mxu0
  %493 = vmatprep.mubr.f32.mxu0 0.0
  %494 = vmatmul.mubr.f32.gmra.mrb[0].mxu0 %v338
  %v495 = vpop.f32.mrb[0].mxu0
  %v496 = vadd.f32 %v265, %v495
  %v497 = vpop.f32.mrb[0].mxu0
  %498 = vmatprep.mubr.f32.mxu0 0.0
  %499 = vmatmul.mubr.f32.gmra.mrb[0].mxu0 %v340
  %v500 = vpop.f32.mrb[0].mxu0
  %v501 = vadd.f32 %v266, %v500
  %v502 = vpop.f32.mrb[0].mxu0
  %503 = vmatprep.mubr.f32.mxu0 0.0
  %504 = vmatmul.mubr.f32.gmra.mrb[0].mxu0 %v342
  %v505 = vpop.f32.mrb[0].mxu0
  %v506 = vadd.f32 %v267, %v505
  %v507 = vpop.f32.mrb[0].mxu0
  %508 = vmatprep.mubr.f32.mxu0 0.0
  %509 = vmatmul.mubr.f32.gmra.mrb[0].mxu0 %v344
  %v510 = vpop.f32.mrb[0].mxu0
  %v511 = vadd.f32 %v268, %v510
  %v512 = vpop.f32.mrb[0].mxu0
  %513 = vmatprep.mubr.f32.mxu0 0.0
  %514 = vmatmul.mubr.f32.gmra.mrb[0].mxu0 %v346
  %v515 = vpop.f32.mrb[0].mxu0
  %v516 = vadd.f32 %v269, %v515
  %v517 = vpop.f32.mrb[0].mxu0
  %518 = vmatprep.mubr.f32.mxu0 0.0
  %519 = vmatmul.mubr.f32.gmra.mrb[0].mxu0 %v348
  %v520 = vpop.f32.mrb[0].mxu0
  %v521 = vadd.f32 %v270, %v520
  %v522 = vpop.f32.mrb[0].mxu0
  %523 = vmatprep.mubr.f32.mxu0 0.0
  %524 = vmatmul.mubr.f32.gmra.mrb[0].mxu0 %v350
  %v525 = vpop.f32.mrb[0].mxu0
  %v526 = vadd.f32 %v271, %v525
  %v527 = vpop.f32.mrb[0].mxu0
  %528 = vdwg.mxu0
  %529 = vmax.xlane.f32.xlu0 %v451
  %v530 = vpop.xlane.xlu0 %529
  %531 = vmax.xlane.f32.xlu0 %v456
  %v532 = vpop.xlane.xlu0 %531
  %533 = vmax.xlane.f32.xlu0 %v461
  %v534 = vpop.xlane.xlu0 %533
  %535 = vmax.xlane.f32.xlu0 %v466
  %v536 = vpop.xlane.xlu0 %535
  %537 = vmax.xlane.f32.xlu0 %v471
  %v538 = vpop.xlane.xlu0 %537
  %539 = vmax.xlane.f32.xlu0 %v476
  %v540 = vpop.xlane.xlu0 %539
  %541 = vmax.xlane.f32.xlu0 %v481
  %v542 = vpop.xlane.xlu0 %541
  %543 = vmax.xlane.f32.xlu0 %v486
  %v544 = vpop.xlane.xlu0 %543
  %545 = vmax.xlane.f32.xlu0 %v491
  %v546 = vpop.xlane.xlu0 %545
  %547 = vmax.xlane.f32.xlu0 %v496
  %v548 = vpop.xlane.xlu0 %547
  %549 = vmax.xlane.f32.xlu0 %v501
  %v550 = vpop.xlane.xlu0 %549
  %551 = vmax.xlane.f32.xlu0 %v506
  %v552 = vpop.xlane.xlu0 %551
  %553 = vmax.xlane.f32.xlu0 %v511
  %v554 = vpop.xlane.xlu0 %553
  %555 = vmax.xlane.f32.xlu0 %v516
  %v556 = vpop.xlane.xlu0 %555
  %557 = vmax.xlane.f32.xlu0 %v521
  %v558 = vpop.xlane.xlu0 %557
  %559 = vmax.xlane.f32.xlu0 %v526
  %v560 = vpop.xlane.xlu0 %559
  %v561 = vsub.f32 %v451, %v530
  %v562 = vsub.f32 %v456, %v532
  %v563 = vsub.f32 %v461, %v534
  %v564 = vsub.f32 %v466, %v536
  %v565 = vsub.f32 %v471, %v538
  %v566 = vsub.f32 %v476, %v540
  %v567 = vsub.f32 %v481, %v542
  %v568 = vsub.f32 %v486, %v544
  %v569 = vsub.f32 %v491, %v546
  %v570 = vsub.f32 %v496, %v548
  %v571 = vsub.f32 %v501, %v550
  %v572 = vsub.f32 %v506, %v552
  %v573 = vsub.f32 %v511, %v554
  %v574 = vsub.f32 %v516, %v556
  %v575 = vsub.f32 %v521, %v558
  %v576 = vsub.f32 %v526, %v560
  %v577 = vmul.f32 %v561, 1.442695
  %v578 = vpow.pop %v577
  %v579 = vmul.f32 %v562, 1.442695
  %v580 = vpow.pop %v579
  %v581 = vmul.f32 %v563, 1.442695
  %v582 = vpow.pop %v581
  %v583 = vmul.f32 %v564, 1.442695
  %v584 = vpow.pop %v583
  %v585 = vmul.f32 %v565, 1.442695
  %v586 = vpow.pop %v585
  %v587 = vmul.f32 %v566, 1.442695
  %v588 = vpow.pop %v587
  %v589 = vmul.f32 %v567, 1.442695
  %v590 = vpow.pop %v589
  %v591 = vmul.f32 %v568, 1.442695
  %v592 = vpow.pop %v591
  %v593 = vmul.f32 %v569, 1.442695
  %v594 = vpow.pop %v593
  %v595 = vmul.f32 %v570, 1.442695
  %v596 = vpow.pop %v595
  %v597 = vmul.f32 %v571, 1.442695
  %v598 = vpow.pop %v597
  %v599 = vmul.f32 %v572, 1.442695
  %v600 = vpow.pop %v599
  %v601 = vmul.f32 %v573, 1.442695
  %v602 = vpow.pop %v601
  %v603 = vmul.f32 %v574, 1.442695
  %v604 = vpow.pop %v603
  %v605 = vmul.f32 %v575, 1.442695
  %v606 = vpow.pop %v605
  %v607 = vmul.f32 %v576, 1.442695
  %v608 = vpow.pop %v607
  %609 = vadd.xlane.f32.xlu0 %v578
  %v610 = vpop.xlane.xlu0 %609
  %611 = vadd.xlane.f32.xlu0 %v580
  %v612 = vpop.xlane.xlu0 %611
  %613 = vadd.xlane.f32.xlu0 %v582
  %v614 = vpop.xlane.xlu0 %613
  %615 = vadd.xlane.f32.xlu0 %v584
  %v616 = vpop.xlane.xlu0 %615
  %617 = vadd.xlane.f32.xlu0 %v586
  %v618 = vpop.xlane.xlu0 %617
  %619 = vadd.xlane.f32.xlu0 %v588
  %v620 = vpop.xlane.xlu0 %619
  %621 = vadd.xlane.f32.xlu0 %v590
  %v622 = vpop.xlane.xlu0 %621
  %623 = vadd.xlane.f32.xlu0 %v592
  %v624 = vpop.xlane.xlu0 %623
  %625 = vadd.xlane.f32.xlu0 %v594
  %v626 = vpop.xlane.xlu0 %625
  %627 = vadd.xlane.f32.xlu0 %v596
  %v628 = vpop.xlane.xlu0 %627
  %629 = vadd.xlane.f32.xlu0 %v598
  %v630 = vpop.xlane.xlu0 %629
  %631 = vadd.xlane.f32.xlu0 %v600
  %v632 = vpop.xlane.xlu0 %631
  %633 = vadd.xlane.f32.xlu0 %v602
  %v634 = vpop.xlane.xlu0 %633
  %635 = vadd.xlane.f32.xlu0 %v604
  %v636 = vpop.xlane.xlu0 %635
  %637 = vadd.xlane.f32.xlu0 %v606
  %v638 = vpop.xlane.xlu0 %637
  %639 = vadd.xlane.f32.xlu0 %v608
  %v640 = vpop.xlane.xlu0 %639
  %v641 = vrcp.pop %v610
  %v642 = vrcp.pop %v612
  %v643 = vrcp.pop %v614
  %v644 = vrcp.pop %v616
  %v645 = vrcp.pop %v618
  %v646 = vrcp.pop %v620
  %v647 = vrcp.pop %v622
  %v648 = vrcp.pop %v624
  %v649 = vrcp.pop %v626
  %v650 = vrcp.pop %v628
  %v651 = vrcp.pop %v630
  %v652 = vrcp.pop %v632
  %v653 = vrcp.pop %v634
  %v654 = vrcp.pop %v636
  %v655 = vrcp.pop %v638
  %v656 = vrcp.pop %v640
  %v657 = vmul.f32 %v578, %v641
  %v658 = vmul.f32 %v580, %v642
  %v659 = vmul.f32 %v582, %v643
  %v660 = vmul.f32 %v584, %v644
  %v661 = vmul.f32 %v586, %v645
  %v662 = vmul.f32 %v588, %v646
  %v663 = vmul.f32 %v590, %v647
  %v664 = vmul.f32 %v592, %v648
  %v665 = vmul.f32 %v594, %v649
  %v666 = vmul.f32 %v596, %v650
  %v667 = vmul.f32 %v598, %v651
  %v668 = vmul.f32 %v600, %v652
  %v669 = vmul.f32 %v602, %v653
  %v670 = vmul.f32 %v604, %v654
  %v671 = vmul.f32 %v606, %v655
  %v672 = vmul.f32 %v608, %v656
  %673 = vrot.lane.b32.xlu0 %v178, 64
  %v674 = vpop.permute.xlu0 %673
  %675 = vrot.lane.b32.xlu0 %v183, 64
  %v676 = vpop.permute.xlu0 %675
  %677 = vrot.lane.b32.xlu0 %v188, 64
  %v678 = vpop.permute.xlu0 %677
  %679 = vrot.lane.b32.xlu0 %v193, 64
  %v680 = vpop.permute.xlu0 %679
  %681 = vrot.lane.b32.xlu0 %v198, 64
  %v682 = vpop.permute.xlu0 %681
  %683 = vrot.lane.b32.xlu0 %v203, 64
  %v684 = vpop.permute.xlu0 %683
  %685 = vrot.lane.b32.xlu0 %v208, 64
  %v686 = vpop.permute.xlu0 %685
  %687 = vrot.lane.b32.xlu0 %v213, 64
  %v688 = vpop.permute.xlu0 %687
  %689 = vrot.lane.b32.xlu0 %v218, 64
  %v690 = vpop.permute.xlu0 %689
  %691 = vrot.lane.b32.xlu0 %v223, 64
  %v692 = vpop.permute.xlu0 %691
  %693 = vrot.lane.b32.xlu0 %v228, 64
  %v694 = vpop.permute.xlu0 %693
  %695 = vrot.lane.b32.xlu0 %v233, 64
  %v696 = vpop.permute.xlu0 %695
  %697 = vrot.lane.b32.xlu0 %v238, 64
  %v698 = vpop.permute.xlu0 %697
  %699 = vrot.lane.b32.xlu0 %v243, 64
  %v700 = vpop.permute.xlu0 %699
  %701 = vrot.lane.b32.xlu0 %v248, 64
  %v702 = vpop.permute.xlu0 %701
  %703 = vrot.lane.b32.xlu0 %v253, 64
  %v704 = vpop.permute.xlu0 %703
  %721 = vmatprep.subr.mxu0 0.0
  %722 = vmatpush1.msra.mxu0 %v674
  %723 = vmatprep.subr.mxu0 0.0
  %724 = vmatpush1.msra.mxu0 %v676
  %725 = vmatprep.subr.mxu0 0.0
  %726 = vmatpush1.msra.mxu0 %v678
  %727 = vmatprep.subr.mxu0 0.0
  %728 = vmatpush1.msra.mxu0 %v680
  %729 = vmatprep.subr.mxu0 0.0
  %730 = vmatpush1.msra.mxu0 %v682
  %731 = vmatprep.subr.mxu0 0.0
  %732 = vmatpush1.msra.mxu0 %v684
  %733 = vmatprep.subr.mxu0 0.0
  %734 = vmatpush1.msra.mxu0 %v686
  %735 = vmatprep.subr.mxu0 0.0
  %736 = vmatpush1.msra.mxu0 %v688
  %737 = vmatprep.subr.mxu0 0.0
  %738 = vmatpush1.msra.mxu0 %v690
  %739 = vmatprep.subr.mxu0 0.0
  %740 = vmatpush1.msra.mxu0 %v692
  %741 = vmatprep.subr.mxu0 0.0
  %742 = vmatpush1.msra.mxu0 %v694
  %743 = vmatprep.subr.mxu0 0.0
  %744 = vmatpush1.msra.mxu0 %v696
  %745 = vmatprep.subr.mxu0 0.0
  %746 = vmatpush1.msra.mxu0 %v698
  %747 = vmatprep.subr.mxu0 0.0
  %748 = vmatpush1.msra.mxu0 %v700
  %749 = vmatprep.subr.mxu0 0.0
  %750 = vmatpush1.msra.mxu0 %v702
  %751 = vmatprep.subr.mxu0 0.0
  %752 = vmatpush1.msra.mxu0 %v704
  %753 = vmatprep.subr.mxu0 0.0
  %754 = vmatpush1.msra.mxu0 0.0
  %755 = vmatprep.subr.mxu0 0.0
  %756 = vmatpush1.msra.mxu0 0.0
  %757 = vmatprep.subr.mxu0 0.0
  %758 = vmatpush1.msra.mxu0 0.0
  %759 = vmatprep.subr.mxu0 0.0
  %760 = vmatpush1.msra.mxu0 0.0
  %761 = vmatprep.subr.mxu0 0.0
  %762 = vmatpush1.msra.mxu0 0.0
  %763 = vmatprep.subr.mxu0 0.0
  %764 = vmatpush1.msra.mxu0 0.0
  %765 = vmatprep.subr.mxu0 0.0
  %766 = vmatpush1.msra.mxu0 0.0
  %767 = vmatprep.subr.mxu0 0.0
  %768 = vmatpush1.msra.mxu0 0.0
  %769 = vmatprep.subr.mxu0 0.0
  %770 = vmatpush1.msra.mxu0 0.0
  %771 = vmatprep.subr.mxu0 0.0
  %772 = vmatpush1.msra.mxu0 0.0
  %773 = vmatprep.subr.mxu0 0.0
  %774 = vmatpush1.msra.mxu0 0.0
  %775 = vmatprep.subr.mxu0 0.0
  %776 = vmatpush1.msra.mxu0 0.0
  %777 = vmatprep.subr.mxu0 0.0
  %778 = vmatpush1.msra.mxu0 0.0
  %779 = vmatprep.subr.mxu0 0.0
  %780 = vmatpush1.msra.mxu0 0.0
  %781 = vmatprep.subr.mxu0 0.0
  %782 = vmatpush1.msra.mxu0 0.0
  %783 = vmatprep.subr.mxu0 0.0
  %784 = vmatpush1.msra.mxu0 0.0
  %785 = vmatprep.mubr.f32.mxu0 0.0
  %786 = vmatmul.mubr.f32.gmra.mrb[0].mxu0 %v657
  %v787 = vpop.f32.mrb[0].mxu0
  %v788 = vadd.f32 0.0, %v787
  %v789 = vpop.f32.mrb[0].mxu0
  %790 = vmatprep.mubr.f32.mxu0 0.0
  %791 = vmatmul.mubr.f32.gmra.mrb[0].mxu0 %v658
  %v792 = vpop.f32.mrb[0].mxu0
  %v793 = vadd.f32 0.0, %v792
  %v794 = vpop.f32.mrb[0].mxu0
  %795 = vmatprep.mubr.f32.mxu0 0.0
  %796 = vmatmul.mubr.f32.gmra.mrb[0].mxu0 %v659
  %v797 = vpop.f32.mrb[0].mxu0
  %v798 = vadd.f32 0.0, %v797
  %v799 = vpop.f32.mrb[0].mxu0
  %800 = vmatprep.mubr.f32.mxu0 0.0
  %801 = vmatmul.mubr.f32.gmra.mrb[0].mxu0 %v660
  %v802 = vpop.f32.mrb[0].mxu0
  %v803 = vadd.f32 0.0, %v802
  %v804 = vpop.f32.mrb[0].mxu0
  %805 = vmatprep.mubr.f32.mxu0 0.0
  %806 = vmatmul.mubr.f32.gmra.mrb[0].mxu0 %v661
  %v807 = vpop.f32.mrb[0].mxu0
  %v808 = vadd.f32 0.0, %v807
  %v809 = vpop.f32.mrb[0].mxu0
  %810 = vmatprep.mubr.f32.mxu0 0.0
  %811 = vmatmul.mubr.f32.gmra.mrb[0].mxu0 %v662
  %v812 = vpop.f32.mrb[0].mxu0
  %v813 = vadd.f32 0.0, %v812
  %v814 = vpop.f32.mrb[0].mxu0
  %815 = vmatprep.mubr.f32.mxu0 0.0
  %816 = vmatmul.mubr.f32.gmra.mrb[0].mxu0 %v663
  %v817 = vpop.f32.mrb[0].mxu0
  %v818 = vadd.f32 0.0, %v817
  %v819 = vpop.f32.mrb[0].mxu0
  %820 = vmatprep.mubr.f32.mxu0 0.0
  %821 = vmatmul.mubr.f32.gmra.mrb[0].mxu0 %v664
  %v822 = vpop.f32.mrb[0].mxu0
  %v823 = vadd.f32 0.0, %v822
  %v824 = vpop.f32.mrb[0].mxu0
  %825 = vmatprep.mubr.f32.mxu0 0.0
  %826 = vmatmul.mubr.f32.gmra.mrb[0].mxu0 %v665
  %v827 = vpop.f32.mrb[0].mxu0
  %v828 = vadd.f32 0.0, %v827
  %v829 = vpop.f32.mrb[0].mxu0
  %830 = vmatprep.mubr.f32.mxu0 0.0
  %831 = vmatmul.mubr.f32.gmra.mrb[0].mxu0 %v666
  %v832 = vpop.f32.mrb[0].mxu0
  %v833 = vadd.f32 0.0, %v832
  %v834 = vpop.f32.mrb[0].mxu0
  %835 = vmatprep.mubr.f32.mxu0 0.0
  %836 = vmatmul.mubr.f32.gmra.mrb[0].mxu0 %v667
  %v837 = vpop.f32.mrb[0].mxu0
  %v838 = vadd.f32 0.0, %v837
  %v839 = vpop.f32.mrb[0].mxu0
  %840 = vmatprep.mubr.f32.mxu0 0.0
  %841 = vmatmul.mubr.f32.gmra.mrb[0].mxu0 %v668
  %v842 = vpop.f32.mrb[0].mxu0
  %v843 = vadd.f32 0.0, %v842
  %v844 = vpop.f32.mrb[0].mxu0
  %845 = vmatprep.mubr.f32.mxu0 0.0
  %846 = vmatmul.mubr.f32.gmra.mrb[0].mxu0 %v669
  %v847 = vpop.f32.mrb[0].mxu0
  %v848 = vadd.f32 0.0, %v847
  %v849 = vpop.f32.mrb[0].mxu0
  %850 = vmatprep.mubr.f32.mxu0 0.0
  %851 = vmatmul.mubr.f32.gmra.mrb[0].mxu0 %v670
  %v852 = vpop.f32.mrb[0].mxu0
  %v853 = vadd.f32 0.0, %v852
  %v854 = vpop.f32.mrb[0].mxu0
  %855 = vmatprep.mubr.f32.mxu0 0.0
  %856 = vmatmul.mubr.f32.gmra.mrb[0].mxu0 %v671
  %v857 = vpop.f32.mrb[0].mxu0
  %v858 = vadd.f32 0.0, %v857
  %v859 = vpop.f32.mrb[0].mxu0
  %860 = vmatprep.mubr.f32.mxu0 0.0
  %861 = vmatmul.mubr.f32.gmra.mrb[0].mxu0 %v672
  %v862 = vpop.f32.mrb[0].mxu0
  %v863 = vadd.f32 0.0, %v862
  %v864 = vpop.f32.mrb[0].mxu0
  %865 = vdwg.mxu0
  %v866 = vld [vmem:[%s3] sm:$0xff]
  %v867 = vld [vmem:[%s3 + $0x8] sm:$0xff]
  %868 = vmatprep.subr.mxu0 0.0
  %869 = vmatpush1.msra.mxu0 %v788
  %870 = vmatprep.subr.mxu0 0.0
  %871 = vmatpush1.msra.mxu0 %v793
  %872 = vmatprep.subr.mxu0 0.0
  %873 = vmatpush1.msra.mxu0 %v798
  %874 = vmatprep.subr.mxu0 0.0
  %875 = vmatpush1.msra.mxu0 %v803
  %876 = vmatprep.subr.mxu0 0.0
  %877 = vmatpush1.msra.mxu0 %v808
  %878 = vmatprep.subr.mxu0 0.0
  %879 = vmatpush1.msra.mxu0 %v813
  %880 = vmatprep.subr.mxu0 0.0
  %881 = vmatpush1.msra.mxu0 %v818
  %882 = vmatprep.subr.mxu0 0.0
  %883 = vmatpush1.msra.mxu0 %v823
  %884 = vmatprep.subr.mxu0 0.0
  %885 = vmatpush1.msra.mxu0 %v828
  %886 = vmatprep.subr.mxu0 0.0
  %887 = vmatpush1.msra.mxu0 %v833
  %888 = vmatprep.subr.mxu0 0.0
  %889 = vmatpush1.msra.mxu0 %v838
  %890 = vmatprep.subr.mxu0 0.0
  %891 = vmatpush1.msra.mxu0 %v843
  %892 = vmatprep.subr.mxu0 0.0
  %893 = vmatpush1.msra.mxu0 %v848
  %894 = vmatprep.subr.mxu0 0.0
  %895 = vmatpush1.msra.mxu0 %v853
  %896 = vmatprep.subr.mxu0 0.0
  %897 = vmatpush1.msra.mxu0 %v858
  %898 = vmatprep.subr.mxu0 0.0
  %899 = vmatpush1.msra.mxu0 %v863
  %900 = vmatprep.subr.mxu0 0.0
  %901 = vmatpush1.msra.mxu0 0.0
  %902 = vmatprep.subr.mxu0 0.0
  %903 = vmatpush1.msra.mxu0 0.0
  %904 = vmatprep.subr.mxu0 0.0
  %905 = vmatpush1.msra.mxu0 0.0
  %906 = vmatprep.subr.mxu0 0.0
  %907 = vmatpush1.msra.mxu0 0.0
  %908 = vmatprep.subr.mxu0 0.0
  %909 = vmatpush1.msra.mxu0 0.0
  %910 = vmatprep.subr.mxu0 0.0
  %911 = vmatpush1.msra.mxu0 0.0
  %912 = vmatprep.subr.mxu0 0.0
  %913 = vmatpush1.msra.mxu0 0.0
  %914 = vmatprep.subr.mxu0 0.0
  %915 = vmatpush1.msra.mxu0 0.0
  %916 = vmatprep.subr.mxu0 0.0
  %917 = vmatpush1.msra.mxu0 0.0
  %918 = vmatprep.subr.mxu0 0.0
  %919 = vmatpush1.msra.mxu0 0.0
  %920 = vmatprep.subr.mxu0 0.0
  %921 = vmatpush1.msra.mxu0 0.0
  %922 = vmatprep.subr.mxu0 0.0
  %923 = vmatpush1.msra.mxu0 0.0
  %924 = vmatprep.subr.mxu0 0.0
  %925 = vmatpush1.msra.mxu0 0.0
  %926 = vmatprep.subr.mxu0 0.0
  %927 = vmatpush1.msra.mxu0 0.0
  %928 = vmatprep.subr.mxu0 0.0
  %929 = vmatpush1.msra.mxu0 0.0
  %930 = vmatprep.subr.mxu0 0.0
  %931 = vmatpush1.msra.mxu0 0.0
  %932 = vmatprep.mubr.f32.mxu0 0.0
  %933 = vmatmul.mubr.f32.gmra.mrb[0].mxu0 %v866
  %v934 = vpop.f32.mrb[0].mxu0
  %v935 = vadd.f32 0.0, %v934
  %v936 = vpop.f32.mrb[0].mxu0
  %937 = vmatprep.mubr.f32.mxu0 0.0
  %938 = vmatmul.mubr.f32.gmra.mrb[0].mxu0 %v867
  %v939 = vpop.f32.mrb[0].mxu0
  %v940 = vadd.f32 0.0, %v939
  %v941 = vpop.f32.mrb[0].mxu0
  %942 = vdwg.mxu0
  %v943 = vld [vmem:[%s5] sm:$0xff]
  %v944 = vld [vmem:[%s5 + $0x8] sm:$0xff]
  %v945 = vld [vmem:[%s5 + $0x10] sm:$0xff]
  %v946 = vld [vmem:[%s5 + $0x18] sm:$0xff]
  %v947 = vld [vmem:[%s6] sm:$0x1]
  %v949 = vlaneseq
  %v950 = vshrl.u32 %v949, 7
  %v951 = vsub.s32 0, %v950
  %v952 = vrot.slane %v947, %v951
  %v955 = vsel %vm62, %v935, 0
  %v958 = vsel %vm62, %v940, 0
  %960 = vmatprep.subr.mxu0 0.0
  %961 = vmatpush1.msra.mxu0 %v943
  %962 = vmatprep.subr.mxu0 0.0
  %963 = vmatpush1.msra.mxu0 %v944
  %964 = vmatprep.subr.mxu0 0.0
  %965 = vmatpush1.msra.mxu0 %v945
  %966 = vmatprep.subr.mxu0 0.0
  %967 = vmatpush1.msra.mxu0 %v946
  %968 = vmatprep.subr.mxu0 0.0
  %969 = vmatpush1.msra.mxu0 0.0
  %970 = vmatprep.subr.mxu0 0.0
  %971 = vmatpush1.msra.mxu0 0.0
  %972 = vmatprep.subr.mxu0 0.0
  %973 = vmatpush1.msra.mxu0 0.0
  %974 = vmatprep.subr.mxu0 0.0
  %975 = vmatpush1.msra.mxu0 0.0
  %976 = vmatprep.subr.mxu0 0.0
  %977 = vmatpush1.msra.mxu0 0.0
  %978 = vmatprep.subr.mxu0 0.0
  %979 = vmatpush1.msra.mxu0 0.0
  %980 = vmatprep.subr.mxu0 0.0
  %981 = vmatpush1.msra.mxu0 0.0
  %982 = vmatprep.subr.mxu0 0.0
  %983 = vmatpush1.msra.mxu0 0.0
  %984 = vmatprep.subr.mxu0 0.0
  %985 = vmatpush1.msra.mxu0 0.0
  %986 = vmatprep.subr.mxu0 0.0
  %987 = vmatpush1.msra.mxu0 0.0
  %988 = vmatprep.subr.mxu0 0.0
  %989 = vmatpush1.msra.mxu0 0.0
  %990 = vmatprep.subr.mxu0 0.0
  %991 = vmatpush1.msra.mxu0 0.0
  %992 = vmatprep.subr.mxu0 0.0
  %993 = vmatpush1.msra.mxu0 0.0
  %994 = vmatprep.subr.mxu0 0.0
  %995 = vmatpush1.msra.mxu0 0.0
  %996 = vmatprep.subr.mxu0 0.0
  %997 = vmatpush1.msra.mxu0 0.0
  %998 = vmatprep.subr.mxu0 0.0
  %999 = vmatpush1.msra.mxu0 0.0
  %1000 = vmatprep.subr.mxu0 0.0
  %1001 = vmatpush1.msra.mxu0 0.0
  %1002 = vmatprep.subr.mxu0 0.0
  %1003 = vmatpush1.msra.mxu0 0.0
  %1004 = vmatprep.subr.mxu0 0.0
  %1005 = vmatpush1.msra.mxu0 0.0
  %1006 = vmatprep.subr.mxu0 0.0
  %1007 = vmatpush1.msra.mxu0 0.0
  %1008 = vmatprep.subr.mxu0 0.0
  %1009 = vmatpush1.msra.mxu0 0.0
  %1010 = vmatprep.subr.mxu0 0.0
  %1011 = vmatpush1.msra.mxu0 0.0
  %1012 = vmatprep.subr.mxu0 0.0
  %1013 = vmatpush1.msra.mxu0 0.0
  %1014 = vmatprep.subr.mxu0 0.0
  %1015 = vmatpush1.msra.mxu0 0.0
  %1016 = vmatprep.subr.mxu0 0.0
  %1017 = vmatpush1.msra.mxu0 0.0
  %1018 = vmatprep.subr.mxu0 0.0
  %1019 = vmatpush1.msra.mxu0 0.0
  %1020 = vmatprep.subr.mxu0 0.0
  %1021 = vmatpush1.msra.mxu0 0.0
  %1022 = vmatprep.subr.mxu0 0.0
  %1023 = vmatpush1.msra.mxu0 0.0
  %1024 = vmatprep.mubr.f32.mxu0 0.0
  %1025 = vmatmul.mubr.f32.gmra.mrb[0].mxu0 %v955
  %v1026 = vpop.f32.mrb[0].mxu0
  %v1027 = vadd.f32 %v952, %v1026
  %v1028 = vpop.f32.mrb[0].mxu0
  %1029 = vmatprep.mubr.f32.mxu0 0.0
  %1030 = vmatmul.mubr.f32.gmra.mrb[0].mxu0 %v958
  %v1031 = vpop.f32.mrb[0].mxu0
  %v1032 = vadd.f32 %v952, %v1031
  %v1033 = vpop.f32.mrb[0].mxu0
  %1034 = vdwg.mxu0
  %vm1035 = vcmask 15360
  %v1036 = vsel %vm1035, %v1027, -inf
  %1037 = vmax.xlane.f32.xlu0 %v1036
  %v1038 = vpop.xlane.xlu0 %1037
  %v1039 = vsel %vm1035, %v1032, -inf
  %1040 = vmax.xlane.f32.xlu0 %v1039
  %v1041 = vpop.xlane.xlu0 %1040
  %v1042 = vsub.f32 %v1027, %v1038
  %v1043 = vsub.f32 %v1032, %v1041
  %v1044 = vmul.f32 %v1042, 1.442695
  %v1045 = vpow.pop %v1044
  %v1046 = vmul.f32 %v1043, 1.442695
  %v1047 = vpow.pop %v1046
  %v1048 = vsel %vm1035, %v1045, 0.0
  %1049 = vadd.xlane.f32.xlu0 %v1048
  %v1050 = vpop.xlane.xlu0 %1049
  %v1051 = vsel %vm1035, %v1047, 0.0
  %1052 = vadd.xlane.f32.xlu0 %v1051
  %v1053 = vpop.xlane.xlu0 %1052
  %v1054 = vlog2.pop %v1050
  %v1055 = vmul.f32 %v1054, 0.6931472
  %v1056 = vlog2.pop %v1053
  %v1057 = vmul.f32 %v1056, 0.6931472
  %v1058 = vadd.f32 %v1055, %v1038
  %v1059 = vadd.f32 %v1057, %v1041
  %v1060 = vsub.f32 %v1027, %v1058
  %v1061 = vsub.f32 %v1032, %v1059
  %1062 = vst.msk [vmem:[%s7] sm:$0xff] %vm1035, %v1060
  %1063 = vst.msk [vmem:[%s7 + $0x8] sm:$0xff] %vm1035, %v1061
  // Predicated region
  $region30: #{tpu_custom_call.1} parent=0 // pred_check
    _
  $region31: #{tpu_custom_call.1} parent=0 // pred_check_branch
    %1065 = sbr.rel (0) target = $region33
  $region32: #{tpu_custom_call.1} parent=0 // pred_region
    _
  $region33: #{tpu_custom_call.1} parent=0 // pred_fallthru
    _
  // Predicated region
  $region34: #{tpu_custom_call.1} parent=0 // pred_check
    _
  $region35: #{tpu_custom_call.1} parent=0 // pred_check_branch
    %1067 = sbr.rel (0) target = $region37
  $region36: #{tpu_custom_call.1} parent=0 // pred_region
    _
  $region37: #{tpu_custom_call.1} parent=0 // pred_fallthru
    _

</llo_original>
